<compile_context>
chip_gen: v5e
topology: v5e:2x2
jax: 0.10.0
libtpu: 0.0.40
codegen_flags: <defaults>
</compile_context>

<pallas_src>
import jax
import jax.numpy as jnp
from jax import lax
from jax.experimental import pallas as pl
from jax.experimental.pallas import tpu as pltpu

_QUATS_PER_ROW = 32     # 32 quaternions * 4 components = 128 lanes
_TILE_ROWS = 4096       # 4096 x 128 x 4 B = 2 MiB per f32 block


def _make_stay_loss_kernel(total_rows: int, block_rows: int):
    """Build the kernel closed over trace-time Python ints (scalars only)."""
    need_mask = (total_rows % block_rows) != 0

    def kernel(x_ref, o_ref):
        i = pl.program_id(0)

        @pl.when(i == 0)
        def _init():
            o_ref[...] = jnp.zeros_like(o_ref)

        # Upcast inside the kernel (VPU has huge slack; halves HBM bytes for bf16).
        vals = x_ref[...].astype(jnp.float32)

        # Identity quaternion [0,0,0,1] rebuilt from a lane iota: lane % 4 == 3
        # is the w component.  No captured array constants.
        lane = lax.broadcasted_iota(jnp.int32, vals.shape, 1)
        is_w = (lane & 3) == 3
        diff = jnp.abs(vals - is_w.astype(jnp.float32))

        if need_mask:
            # Ragged last tile: rows past total_rows hold unspecified data.
            row = i * block_rows + lax.broadcasted_iota(jnp.int32, vals.shape, 0)
            diff = jnp.where(row < total_rows, diff, 0.0)

        # Lane-shaped accumulation; cross-lane reduce deferred to the wrapper.
        o_ref[...] += jnp.sum(diff, axis=0, keepdims=True)

    return kernel


def stay_loss(virtual_quat: jax.Array) -> jax.Array:
    """Pallas equivalent of Stay_loss.forward(virtual_quat)."""
    assert virtual_quat.shape[-1] == 4, "quaternion last dim must be 4"
    x = virtual_quat.reshape(-1, 4)           # free (bitcast) reshape
    batch = x.shape[0]
    count = batch * 4                         # ORIGINAL element count -> mean divisor

    zero_w = jnp.array([0.0, 0.0, 0.0, 1.0], dtype=jnp.float32)  # wrapper-side only

    main_b = (batch // _QUATS_PER_ROW) * _QUATS_PER_ROW
    rem_b = batch - main_b

    # Tiny-input fast path: less than one lane-dense row -> fused XLA beats a launch.
    if main_b == 0:
        return jnp.mean(jnp.abs(x.astype(jnp.float32) - zero_w))

    # Aligned case: pure metadata reshape, zero extra HBM traffic.
    x_main = x if rem_b == 0 else x[:main_b]
    rows = main_b // _QUATS_PER_ROW
    x2d = x_main.reshape(rows, 128)           # lane-dense slab, native dtype

    block_rows = min(rows, _TILE_ROWS)
    grid = (pl.cdiv(rows, block_rows),)

    lane_sums = pl.pallas_call(
        _make_stay_loss_kernel(rows, block_rows),
        out_shape=jax.ShapeDtypeStruct((1, 128), jnp.float32),
        grid_spec=pltpu.PrefetchScalarGridSpec(
            num_scalar_prefetch=0,
            grid=grid,
            in_specs=[pl.BlockSpec((block_rows, 128), lambda i: (i, 0))],
            out_specs=pl.BlockSpec((1, 128), lambda i: (0, 0)),
        ),
        compiler_params=pltpu.CompilerParams(
            dimension_semantics=("arbitrary",),   # grid axis is a reduction
        ),
    )(x2d)

    total = jnp.sum(lane_sums)
    if rem_b:
        # <32-quaternion remainder: tiny plain-jnp partial sum.
        tail = x[main_b:].astype(jnp.float32)
        total = total + jnp.sum(jnp.abs(tail - zero_w))

    return total * (1.0 / count)


if __name__ == "__main__":
    zero = jnp.array([0.0, 0.0, 0.0, 1.0], dtype=jnp.float32)

    # Small batch of quaternions (kernel path: 6 full lane-dense rows + 8-quat tail).
    vq = jax.random.normal(jax.random.PRNGKey(0), (200, 4), dtype=jnp.float32)
    loss = stay_loss(vq)
    jax.block_until_ready(loss)
    ref = jnp.mean(jnp.abs(vq - zero))
    assert jnp.allclose(loss, ref, atol=1e-6, rtol=1e-6), (loss, ref)

    # Tiny batch -> jnp fast path.
    vq_small = jax.random.normal(jax.random.PRNGKey(1), (8, 4), dtype=jnp.float32)
    loss_small = stay_loss(vq_small)
    jax.block_until_ready(loss_small)
    ref_small = jnp.mean(jnp.abs(vq_small - zero))
    assert jnp.allclose(loss_small, ref_small, atol=1e-6, rtol=1e-6), (loss_small, ref_small)

    # Larger, unaligned batch: multi-step grid, in-kernel row mask, quat tail.
    big = jax.random.normal(jax.random.PRNGKey(2), (150_003, 4), dtype=jnp.float32)
    loss_big = stay_loss(big)
    jax.block_until_ready(loss_big)
    ref_big = jnp.mean(jnp.abs(big - zero))
    assert jnp.allclose(loss_big, ref_big, atol=1e-5, rtol=1e-5), (loss_big, ref_big)

    # bf16 input streamed natively, upcast in-kernel.
    big_bf16 = jax.random.normal(jax.random.PRNGKey(3), (131_072, 4),
                                 dtype=jnp.float32).astype(jnp.bfloat16)
    loss_bf16 = stay_loss(big_bf16)
    jax.block_until_ready(loss_bf16)
    ref_bf16 = jnp.mean(jnp.abs(big_bf16.astype(jnp.float32) - zero))
    assert jnp.allclose(loss_bf16, ref_bf16, atol=1e-5, rtol=1e-4), (loss_bf16, ref_bf16)

    print("KERNEL_OK")
</pallas_src>

<mosaic_0001>
module attributes {stable_mosaic.version = 11 : i64} {
  func.func @kernel(%arg0: i32, %arg1: memref<6x128xf32, #tpu.memory_space<vmem>>, %arg2: memref<1x128xf32, #tpu.memory_space<vmem>>) attributes {dimension_semantics = [#tpu.dimension_semantics<arbitrary>], iteration_bounds = array<i64: 1>, scalar_prefetch = 0 : i64, scratch_operands = 0 : i64, tpu.core_type = #tpu.core_type<tc>, window_params = [{transform_indices = @transform_0, window_bounds = array<i64: 6, 128>}, {pipeline_mode = #tpu.pipeline_mode<synchronous>, transform_indices = @transform_1, window_bounds = array<i64: 1, 128>}]} {
    %c0_i32 = arith.constant 0 : i32
    %0 = arith.cmpi eq, %arg0, %c0_i32 : i32
    %1 = arith.extui %0 : i1 to i32
    %c0_i32_0 = arith.constant 0 : i32
    %2 = arith.cmpi ne, %1, %c0_i32_0 : i32
    scf.if %2 {
      %cst_7 = arith.constant 0.000000e+00 : f32
      %18 = vector.broadcast %cst_7 : f32 to vector<1x128xf32>
      %c0_8 = arith.constant 0 : index
      %c0_9 = arith.constant 0 : index
      %19 = vector.load %arg2[%c0_8, %c0_9] : memref<1x128xf32, #tpu.memory_space<vmem>>, vector<1x128xf32>
      tpu.vector_store %arg2[%c0_8, %c0_9], %18 {strides = array<i32>} : memref<1x128xf32, #tpu.memory_space<vmem>>, vector<1x128xf32>,
    } else {
    }
    %c0 = arith.constant 0 : index
    %c0_1 = arith.constant 0 : index
    %3 = vector.load %arg1[%c0, %c0_1] : memref<6x128xf32, #tpu.memory_space<vmem>>, vector<6x128xf32>
    %4 = tpu.iota {dimensions = array<i32: 1>} : vector<6x128xi32>
    %c3_i32 = arith.constant 3 : i32
    %5 = vector.broadcast %c3_i32 : i32 to vector<6x128xi32>
    %6 = arith.andi %4, %5 : vector<6x128xi32>
    %c3_i32_2 = arith.constant 3 : i32
    %7 = vector.broadcast %c3_i32_2 : i32 to vector<6x128xi32>
    %8 = arith.cmpi eq, %6, %7 : vector<6x128xi32>
    %9 = arith.extui %8 : vector<6x128xi1> to vector<6x128xi32>
    %10 = arith.sitofp %9 : vector<6x128xi32> to vector<6x128xf32>
    %11 = arith.subf %3, %10 : vector<6x128xf32>
    %12 = math.absf %11 : vector<6x128xf32>
    %c0_3 = arith.constant 0 : index
    %c0_4 = arith.constant 0 : index
    %13 = vector.load %arg2[%c0_3, %c0_4] : memref<1x128xf32, #tpu.memory_space<vmem>>, vector<1x128xf32>
    %cst = arith.constant dense<0.000000e+00> : vector<128xf32>
    %14 = vector.multi_reduction <add>, %12, %cst [0] : vector<6x128xf32> to vector<128xf32>
    %15 = vector.shape_cast %14 : vector<128xf32> to vector<1x128xf32>
    %16 = arith.addf %13, %15 : vector<1x128xf32>
    %c0_5 = arith.constant 0 : index
    %c0_6 = arith.constant 0 : index
    %17 = vector.load %arg2[%c0_5, %c0_6] : memref<1x128xf32, #tpu.memory_space<vmem>>, vector<1x128xf32>
    tpu.vector_store %arg2[%c0_5, %c0_6], %16 {strides = array<i32>} : memref<1x128xf32, #tpu.memory_space<vmem>>, vector<1x128xf32>,
    return
  }
  func.func @transform_0(%arg0: i32) -> (i32, i32) {
    %c0_i32 = arith.constant 0 : i32
    %c0_i32_0 = arith.constant 0 : i32
    return %arg0, %c0_i32 : i32, i32
  }
  func.func @transform_1(%arg0: i32) -> (i32, i32) {
    %c0_i32 = arith.constant 0 : i32
    %c0_i32_0 = arith.constant 0 : i32
    %c0_i32_1 = arith.constant 0 : i32
    return %c0_i32, %c0_i32_0 : i32, i32
  }
}

</mosaic_0001>

<llo_original>
// kernel: tpu_custom_call.1
$region0: #{tpu_custom_call.1}
  #allocation0 [shape = 'u32[]', space=smem, size = 0x4, offset = 0x4, fixed_abs, tag = 'smem constant byte address 0x4 - core index']
  #allocation1 [shape = 'u32[72,128]{1,0:T(1,128)}', space=vmem, size = 0x9000, scoped, tag = 'internal scratch']
  %s0 = inlined_call_operand.hbm [shape: f32[6,128], index: 0, kind: input, shape index: {}]
  %s1 = inlined_call_operand.hbm [shape: f32[1,128], index: 1, kind: output, shape index: {}]
  %s2 = sld [smem:[#allocation0]]
  $region22: #{tpu_custom_call.1} parent=0
    _
  %s4 = ssub.s32 1, %s2
  %s5 = scalar_select 0, %s4, %s2
  $region1: #{tpu_custom_call.1} parent=0
    #allocation2 [shape = 'u8[4096]{0}', space=vmem, size = 0x1000, scoped, tag = 'input window, operand 0, single buffered']
    #allocation3 [shape = 's32[1]{0}', space=sflag, size = 0x4, scoped, tag = 'scoped memory for tpu_custom_call.1']
    #allocation4 [shape = 's32[1]{0}', space=sflag, size = 0x4, scoped, tag = 'scoped memory for tpu_custom_call.1']
    #allocation5 [shape = 'u8[512]{0}', space=vmem, size = 0x400, scoped, tag = 'output window, operand 0, single buffered']
    %6 = vsyncpa [#allocation3], 0
    %7 = vsyncpa [#allocation4], 0
    // Predicated region
    $region2: #{tpu_custom_call.1} parent=1 // pred_check
      _
    $region3: #{tpu_custom_call.1} parent=1 // pred_check_branch
      %9 = sbr.rel (0) target = $region5
    $region4: #{tpu_custom_call.1} parent=1 // pred_region
      %11 = vsyncadd [#allocation3], 0
      %s13 = sshll.u32 %s0, 4
      %s14 = int_to_ptr.hbm [resolvable:$true] %s13
      %s15 = sshll.u32 [#allocation2], 4
      %s16 = int_to_ptr.vmem [resolvable:$true] %s15
      %18 = dma.hbm_to_vmem [thread:$0]  %s14, 128, %s16, [#allocation3]
    $region5: #{tpu_custom_call.1} parent=1 // pred_fallthru
      _
    // Predicated region
    $region6: #{tpu_custom_call.1} parent=1 // pred_check
      _
    $region7: #{tpu_custom_call.1} parent=1 // pred_check_branch
      %20 = sbr.rel (0) target = $region9
    $region8: #{tpu_custom_call.1} parent=1 // pred_region
      %22 = dma.done [#allocation3], 128
    $region9: #{tpu_custom_call.1} parent=1 // pred_fallthru
      _
    %p23 = scmp.eq.s32.totalorder 0, 0
    // Predicated region
    $region10: #{tpu_custom_call.1} parent=1 // pred_check
      %p24 = pneg %p23
    $region11: #{tpu_custom_call.1} parent=1 // pred_check_branch
      %26 = sbr.rel (%p24) target = $region13
    $region12: #{tpu_custom_call.1} parent=1 // pred_region
      %27 = vst [vmem:[#allocation5] sm:$0x1] 0.0
    $region13: #{tpu_custom_call.1} parent=1 // pred_fallthru
      _
    %v28 = vld [vmem:[#allocation2] sm:$0x3f]
    %v29 = vlaneseq
    %v30 = vand.u32 %v29, 127
    %v31 = vand.u32 %v30, 3
    %vm32 = vcmp.eq.s32.totalorder %v31, 3
    %v33 = vsel %vm32, 1, 0
    %v34 = vcvt.s32.f32 %v33
    %v35 = vsub.f32 %v28, %v34
    %v36 = vand.u32 2147483647, %v35
    %v37 = vld [vmem:[#allocation5] sm:$0x1]
    %vm38 = vcmask 1045504
    %v39 = vsel %vm38, %v36, 0.0
    %v40 = vrot.slane %v39, 4
    %v41 = vadd.f32 %v39, %v40
    %v42 = vrot.slane %v41, 2
    %v43 = vadd.f32 %v41, %v42
    %v44 = vrot.slane %v43, 1
    %v45 = vadd.f32 %v43, %v44
    %v46 = vadd.f32 %v37, %v45
    %47 = vst [vmem:[#allocation5] sm:$0x1] %v46
    // Predicated region
    $region14: #{tpu_custom_call.1} parent=1 // pred_check
      _
    $region15: #{tpu_custom_call.1} parent=1 // pred_check_branch
      %49 = sbr.rel (0) target = $region17
    $region16: #{tpu_custom_call.1} parent=1 // pred_region
      %51 = vsyncadd [#allocation4], 0
      %s53 = sshll.u32 [#allocation5], 4
      %s54 = int_to_ptr.vmem [resolvable:$true] %s53
      %s55 = sshll.u32 %s1, 4
      %s56 = int_to_ptr.hbm [resolvable:$true] %s55
      %58 = dma.vmem_to_hbm [thread:$0]  %s54, 16, %s56, [#allocation4]
    $region17: #{tpu_custom_call.1} parent=1 // pred_fallthru
      _
    // Predicated region
    $region18: #{tpu_custom_call.1} parent=1 // pred_check
      _
    $region19: #{tpu_custom_call.1} parent=1 // pred_check_branch
      %60 = sbr.rel (0) target = $region21
    $region20: #{tpu_custom_call.1} parent=1 // pred_region
      %62 = dma.done [#allocation4], 16
    $region21: #{tpu_custom_call.1} parent=1 // pred_fallthru
      _
    %63 = vsyncpa [#allocation3], 1
    %64 = vsyncpa [#allocation4], 1

</llo_original>
